<compile_context>
chip_gen: v7x
topology: tpu7x:2x2x1
jax: 0.10.0
libtpu: 0.0.40
codegen_flags: <defaults>
</compile_context>

<pallas_src>
import jax
import jax.numpy as jnp
from jax.experimental import pallas as pl
from jax.experimental.pallas import tpu as pltpu

NB_ACTIONS = 2
NB_OBSERVATIONS = 4
DEFAULT_TILE_B = 4096  # lanes of batch per grid step; sweep 2048-8192


def _round_up(n, m):
    return ((n + m - 1) // m) * m


def dueling_q_kernel(x_ref, w1_ref, b1_ref, w2_ref, b2_ref, w3_ref, b3_ref,
                     wq_ref, bq_ref, out_ref):
    """Batch-in-lanes forward: all activations are (features, tile_b)."""
    cdt = w1_ref.dtype  # compute/storage dtype of the weights (f32 or bf16)

    x = x_ref[...].astype(cdt)                                   # (4, TB)

    # Trunk: Linear(4,128) -> ReLU -> Linear(128,64) -> ReLU -> Linear(64,64)
    h = jnp.dot(w1_ref[...], x, preferred_element_type=jnp.float32) + b1_ref[...]
    h = jnp.maximum(h.astype(cdt), 0)                            # (128, TB)
    h = jnp.dot(w2_ref[...], h, preferred_element_type=jnp.float32) + b2_ref[...]
    h = jnp.maximum(h.astype(cdt), 0)                            # (64, TB)
    f = jnp.dot(w3_ref[...], h, preferred_element_type=jnp.float32) + b3_ref[...]
    # Shared ReLU feeding both heads (both heads start with nn.ReLU()).
    f = jnp.maximum(f.astype(cdt), 0)                            # (64, TB)

    # Fused dueling head: Q = W_q @ f + b_q  (single MXU pass, no XLU reduce).
    q = jnp.dot(wq_ref[...], f, preferred_element_type=jnp.float32) + bq_ref[...]
    out_ref[...] = q.astype(out_ref.dtype)                       # (A, TB), lane-dense


def prepare_params(params, compute_dtype=jnp.float32):
    """One-time parameter prep (call at param-update time, not per forward).

    Input `params` use the (in_features, out_features) weight layout of
    init_params/reference_forward.  Returns weights transposed to
    (out_features, in_features) in `compute_dtype` (bf16 recommended on
    v6e/v7x, f32 on v5e) and biases as f32 (out_features, 1) columns, with the
    dueling value/advantage/mean-subtraction folded into a single head.
    """
    (w1, b1, w2, b2, w3, b3, wa, ba, wv, bv) = params

    # Exact identity: Q = val + adv - mean(adv)  ==  f @ W_q + b_q  with
    #   W_q = wv + wa - mean_cols(wa),  b_q = bv + ba - mean(ba).
    wq = wv + wa - jnp.mean(wa, axis=1, keepdims=True)           # (64, A)
    bq = bv + ba - jnp.mean(ba, axis=1, keepdims=True)           # (1, A)

    def prep_w(w):   # (in, out) -> (out, in), cast to compute dtype
        return jnp.asarray(w.T, dtype=compute_dtype)

    def prep_b(b):   # (1, out) -> (out, 1), stays f32 (added to f32 accumulator)
        return jnp.asarray(b.T, dtype=jnp.float32)

    return (prep_w(w1), prep_b(b1), prep_w(w2), prep_b(b2),
            prep_w(w3), prep_b(b3), prep_w(wq), prep_b(bq))


def dueling_q_forward(x, prepared, *, tile_b=DEFAULT_TILE_B):
    """Dueling Q forward pass.  x: (B, nb_observations) f32 -> (B, nb_actions) f32."""
    w1t, b1t, w2t, b2t, w3t, b3t, wqt, bqt = prepared

    B = x.shape[0]
    b_ceil = _round_up(max(B, 1), 128)          # batch lives on the lane axis
    tile_b = max(128, min(_round_up(tile_b, 128), b_ceil))
    n_steps = pl.cdiv(b_ceil, tile_b)
    # v7x megacore: make sure there are >=2 grid steps to shard across the two
    # TensorCores whenever the batch spans >=2 lane tiles (no-op on v5e/v6e).
    if b_ceil >= 256 and n_steps < 2:
        n_steps = 2
    tile_b = _round_up(pl.cdiv(b_ceil, n_steps), 128)
    b_pad = tile_b * n_steps

    # Batch-in-lanes input: x^T padded to (nb_observations, b_pad).  This is a
    # tiny (16 B/row) reshuffle; padded columns are zeros and are sliced away.
    xt = jnp.pad(x.T, ((0, 0), (0, b_pad - B)))

    def resident(arr):
        # Whole-array block with a constant index map: stays VMEM-resident
        # across grid steps (no re-DMA when the block index is unchanged).
        return pl.BlockSpec(arr.shape, lambda i: (0, 0))

    out = pl.pallas_call(
        dueling_q_kernel,
        out_shape=jax.ShapeDtypeStruct((NB_ACTIONS, b_pad), jnp.float32),
        grid=(n_steps,),
        in_specs=[
            pl.BlockSpec((NB_OBSERVATIONS, tile_b), lambda i: (0, i)),  # x tile
            resident(w1t), resident(b1t),
            resident(w2t), resident(b2t),
            resident(w3t), resident(b3t),
            resident(wqt), resident(bqt),
        ],
        out_specs=pl.BlockSpec((NB_ACTIONS, tile_b), lambda i: (0, i)),
        compiler_params=pltpu.CompilerParams(
            dimension_semantics=("parallel",)),   # megacore sharding on v7x
    )(xt, w1t, b1t, w2t, b2t, w3t, b3t, wqt, bqt)

    return out[:, :B].T


def init_params(key):
    """Deterministic init mimicking PyTorch's uniform(-1/sqrt(fan_in), ...).

    Weights are (in_features, out_features), biases (1, out_features).
    """
    def linear(key, fan_in, fan_out):
        kw, kb = jax.random.split(key)
        bound = 1.0 / jnp.sqrt(float(fan_in))
        w = jax.random.uniform(kw, (fan_in, fan_out), jnp.float32, -bound, bound)
        b = jax.random.uniform(kb, (1, fan_out), jnp.float32, -bound, bound)
        return w, b

    k1, k2, k3, ka, kv = jax.random.split(key, 5)
    w1, b1 = linear(k1, NB_OBSERVATIONS, 128)
    w2, b2 = linear(k2, 128, 64)
    w3, b3 = linear(k3, 64, 64)
    wa, ba = linear(ka, 64, NB_ACTIONS)
    wv, bv = linear(kv, 64, 1)
    return (w1, b1, w2, b2, w3, b3, wa, ba, wv, bv)


def reference_forward(x, params):
    """Plain-JAX reference implementing the original (unfused) PyTorch math."""
    (w1, b1, w2, b2, w3, b3, wa, ba, wv, bv) = params
    h = jnp.maximum(x @ w1 + b1, 0.0)
    h = jnp.maximum(h @ w2 + b2, 0.0)
    feat = h @ w3 + b3
    f = jnp.maximum(feat, 0.0)
    adv = f @ wa + ba
    val = f @ wv + bv
    return val + adv - jnp.mean(adv, axis=1, keepdims=True)


if __name__ == "__main__":
    key = jax.random.PRNGKey(0)
    kx, kx2, kp = jax.random.split(key, 3)
    params = init_params(kp)

    # One-time parameter prep (head fusion, transposition, dtype cast).
    prep_f32 = jax.tree_util.tree_map(jax.block_until_ready,
                                      prepare_params(params, jnp.float32))
    prep_bf16 = jax.tree_util.tree_map(jax.block_until_ready,
                                       prepare_params(params, jnp.bfloat16))

    # --- Test 1: small batch, single grid step, f32 (strict check). ---
    B1 = 8
    x1 = jax.random.normal(kx, (B1, NB_OBSERVATIONS), dtype=jnp.float32)
    out1 = jax.block_until_ready(dueling_q_forward(x1, prep_f32))
    ref1 = reference_forward(x1, params)
    assert out1.shape == (B1, NB_ACTIONS)
    assert jnp.allclose(out1, ref1, atol=1e-4, rtol=1e-4)

    # --- Test 2: batch spanning multiple lane tiles -> multi-step grid + padding. ---
    B2 = 300
    x2 = jax.random.normal(kx2, (B2, NB_OBSERVATIONS), dtype=jnp.float32)
    out2 = jax.block_until_ready(dueling_q_forward(x2, prep_f32, tile_b=256))
    ref2 = reference_forward(x2, params)
    assert out2.shape == (B2, NB_ACTIONS)
    assert jnp.allclose(out2, ref2, atol=1e-4, rtol=1e-4)

    # --- Test 3: bf16 weight/activation path (v6e/v7x), loose tolerance. ---
    out3 = jax.block_until_ready(dueling_q_forward(x2, prep_bf16, tile_b=256))
    assert out3.shape == (B2, NB_ACTIONS)
    assert jnp.allclose(out3, ref2, atol=5e-2, rtol=5e-2)

    print("KERNEL_OK")
</pallas_src>

<mosaic_0001>
module attributes {stable_mosaic.version = 11 : i64} {
  func.func @dueling_q_kernel(%arg0: i32, %arg1: memref<4x128xf32, #tpu.memory_space<vmem>>, %arg2: memref<128x4xf32, #tpu.memory_space<vmem>>, %arg3: memref<128x1xf32, #tpu.memory_space<vmem>>, %arg4: memref<64x128xf32, #tpu.memory_space<vmem>>, %arg5: memref<64x1xf32, #tpu.memory_space<vmem>>, %arg6: memref<64x64xf32, #tpu.memory_space<vmem>>, %arg7: memref<64x1xf32, #tpu.memory_space<vmem>>, %arg8: memref<2x64xf32, #tpu.memory_space<vmem>>, %arg9: memref<2x1xf32, #tpu.memory_space<vmem>>, %arg10: memref<2x128xf32, #tpu.memory_space<vmem>>) attributes {dimension_semantics = [#tpu.dimension_semantics<parallel>], iteration_bounds = array<i64: 1>, scalar_prefetch = 0 : i64, scratch_operands = 0 : i64, tpu.core_type = #tpu.core_type<tc>, window_params = [{transform_indices = @transform_0, window_bounds = array<i64: 4, 128>}, {pipeline_mode = #tpu.pipeline_mode<synchronous>, transform_indices = @transform_1, window_bounds = array<i64: 128, 4>}, {pipeline_mode = #tpu.pipeline_mode<synchronous>, transform_indices = @transform_2, window_bounds = array<i64: 128, 1>}, {pipeline_mode = #tpu.pipeline_mode<synchronous>, transform_indices = @transform_3, window_bounds = array<i64: 64, 128>}, {pipeline_mode = #tpu.pipeline_mode<synchronous>, transform_indices = @transform_4, window_bounds = array<i64: 64, 1>}, {pipeline_mode = #tpu.pipeline_mode<synchronous>, transform_indices = @transform_5, window_bounds = array<i64: 64, 64>}, {pipeline_mode = #tpu.pipeline_mode<synchronous>, transform_indices = @transform_6, window_bounds = array<i64: 64, 1>}, {pipeline_mode = #tpu.pipeline_mode<synchronous>, transform_indices = @transform_7, window_bounds = array<i64: 2, 64>}, {pipeline_mode = #tpu.pipeline_mode<synchronous>, transform_indices = @transform_8, window_bounds = array<i64: 2, 1>}, {transform_indices = @transform_9, window_bounds = array<i64: 2, 128>}]} {
    %c0 = arith.constant 0 : index
    %c0_0 = arith.constant 0 : index
    %0 = vector.load %arg1[%c0, %c0_0] : memref<4x128xf32, #tpu.memory_space<vmem>>, vector<4x128xf32>
    %c0_1 = arith.constant 0 : index
    %c0_2 = arith.constant 0 : index
    %1 = vector.load %arg2[%c0_1, %c0_2] : memref<128x4xf32, #tpu.memory_space<vmem>>, vector<128x4xf32>
    %cst = arith.constant dense<0.000000e+00> : vector<128x128xf32>
    %2 = tpu.matmul %1, %0, %cst {dimension_numbers = #tpu.dot_dimension_numbers<[1], [0], [0], [1], [0, 0, 1, 1], [], []>} : vector<128x4xf32>, vector<4x128xf32>, vector<128x128xf32> -> vector<128x128xf32>
    %c0_3 = arith.constant 0 : index
    %c0_4 = arith.constant 0 : index
    %3 = vector.load %arg3[%c0_3, %c0_4] : memref<128x1xf32, #tpu.memory_space<vmem>>, vector<128x1xf32>
    %4 = vector.broadcast %3 : vector<128x1xf32> to vector<128x128xf32>
    %5 = arith.addf %2, %4 : vector<128x128xf32>
    %cst_5 = arith.constant 0.000000e+00 : f32
    %6 = vector.broadcast %cst_5 : f32 to vector<128x128xf32>
    %7 = arith.maximumf %5, %6 : vector<128x128xf32>
    %c0_6 = arith.constant 0 : index
    %c0_7 = arith.constant 0 : index
    %8 = vector.load %arg4[%c0_6, %c0_7] : memref<64x128xf32, #tpu.memory_space<vmem>>, vector<64x128xf32>
    %cst_8 = arith.constant dense<0.000000e+00> : vector<64x128xf32>
    %9 = tpu.matmul %8, %7, %cst_8 {dimension_numbers = #tpu.dot_dimension_numbers<[1], [0], [0], [1], [0, 0, 1, 1], [], []>} : vector<64x128xf32>, vector<128x128xf32>, vector<64x128xf32> -> vector<64x128xf32>
    %c0_9 = arith.constant 0 : index
    %c0_10 = arith.constant 0 : index
    %10 = vector.load %arg5[%c0_9, %c0_10] : memref<64x1xf32, #tpu.memory_space<vmem>>, vector<64x1xf32>
    %11 = vector.broadcast %10 : vector<64x1xf32> to vector<64x128xf32>
    %12 = arith.addf %9, %11 : vector<64x128xf32>
    %cst_11 = arith.constant 0.000000e+00 : f32
    %13 = vector.broadcast %cst_11 : f32 to vector<64x128xf32>
    %14 = arith.maximumf %12, %13 : vector<64x128xf32>
    %c0_12 = arith.constant 0 : index
    %c0_13 = arith.constant 0 : index
    %15 = vector.load %arg6[%c0_12, %c0_13] : memref<64x64xf32, #tpu.memory_space<vmem>>, vector<64x64xf32>
    %cst_14 = arith.constant dense<0.000000e+00> : vector<64x128xf32>
    %16 = tpu.matmul %15, %14, %cst_14 {dimension_numbers = #tpu.dot_dimension_numbers<[1], [0], [0], [1], [0, 0, 1, 1], [], []>} : vector<64x64xf32>, vector<64x128xf32>, vector<64x128xf32> -> vector<64x128xf32>
    %c0_15 = arith.constant 0 : index
    %c0_16 = arith.constant 0 : index
    %17 = vector.load %arg7[%c0_15, %c0_16] : memref<64x1xf32, #tpu.memory_space<vmem>>, vector<64x1xf32>
    %18 = vector.broadcast %17 : vector<64x1xf32> to vector<64x128xf32>
    %19 = arith.addf %16, %18 : vector<64x128xf32>
    %cst_17 = arith.constant 0.000000e+00 : f32
    %20 = vector.broadcast %cst_17 : f32 to vector<64x128xf32>
    %21 = arith.maximumf %19, %20 : vector<64x128xf32>
    %c0_18 = arith.constant 0 : index
    %c0_19 = arith.constant 0 : index
    %22 = vector.load %arg8[%c0_18, %c0_19] : memref<2x64xf32, #tpu.memory_space<vmem>>, vector<2x64xf32>
    %cst_20 = arith.constant dense<0.000000e+00> : vector<2x128xf32>
    %23 = tpu.matmul %22, %21, %cst_20 {dimension_numbers = #tpu.dot_dimension_numbers<[1], [0], [0], [1], [0, 0, 1, 1], [], []>} : vector<2x64xf32>, vector<64x128xf32>, vector<2x128xf32> -> vector<2x128xf32>
    %c0_21 = arith.constant 0 : index
    %c0_22 = arith.constant 0 : index
    %24 = vector.load %arg9[%c0_21, %c0_22] : memref<2x1xf32, #tpu.memory_space<vmem>>, vector<2x1xf32>
    %25 = vector.broadcast %24 : vector<2x1xf32> to vector<2x128xf32>
    %26 = arith.addf %23, %25 : vector<2x128xf32>
    %c0_23 = arith.constant 0 : index
    %c0_24 = arith.constant 0 : index
    %27 = vector.load %arg10[%c0_23, %c0_24] : memref<2x128xf32, #tpu.memory_space<vmem>>, vector<2x128xf32>
    tpu.vector_store %arg10[%c0_23, %c0_24], %26 {strides = array<i32>} : memref<2x128xf32, #tpu.memory_space<vmem>>, vector<2x128xf32>,
    return
  }
  func.func @transform_0(%arg0: i32) -> (i32, i32) {
    %c0_i32 = arith.constant 0 : i32
    %c0_i32_0 = arith.constant 0 : i32
    return %c0_i32, %arg0 : i32, i32
  }
  func.func @transform_1(%arg0: i32) -> (i32, i32) {
    %c0_i32 = arith.constant 0 : i32
    %c0_i32_0 = arith.constant 0 : i32
    %c0_i32_1 = arith.constant 0 : i32
    return %c0_i32, %c0_i32_0 : i32, i32
  }
  func.func @transform_2(%arg0: i32) -> (i32, i32) {
    %c0_i32 = arith.constant 0 : i32
    %c0_i32_0 = arith.constant 0 : i32
    %c0_i32_1 = arith.constant 0 : i32
    return %c0_i32, %c0_i32_0 : i32, i32
  }
  func.func @transform_3(%arg0: i32) -> (i32, i32) {
    %c0_i32 = arith.constant 0 : i32
    %c0_i32_0 = arith.constant 0 : i32
    %c0_i32_1 = arith.constant 0 : i32
    return %c0_i32, %c0_i32_0 : i32, i32
  }
  func.func @transform_4(%arg0: i32) -> (i32, i32) {
    %c0_i32 = arith.constant 0 : i32
    %c0_i32_0 = arith.constant 0 : i32
    %c0_i32_1 = arith.constant 0 : i32
    return %c0_i32, %c0_i32_0 : i32, i32
  }
  func.func @transform_5(%arg0: i32) -> (i32, i32) {
    %c0_i32 = arith.constant 0 : i32
    %c0_i32_0 = arith.constant 0 : i32
    %c0_i32_1 = arith.constant 0 : i32
    return %c0_i32, %c0_i32_0 : i32, i32
  }
  func.func @transform_6(%arg0: i32) -> (i32, i32) {
    %c0_i32 = arith.constant 0 : i32
    %c0_i32_0 = arith.constant 0 : i32
    %c0_i32_1 = arith.constant 0 : i32
    return %c0_i32, %c0_i32_0 : i32, i32
  }
  func.func @transform_7(%arg0: i32) -> (i32, i32) {
    %c0_i32 = arith.constant 0 : i32
    %c0_i32_0 = arith.constant 0 : i32
    %c0_i32_1 = arith.constant 0 : i32
    return %c0_i32, %c0_i32_0 : i32, i32
  }
  func.func @transform_8(%arg0: i32) -> (i32, i32) {
    %c0_i32 = arith.constant 0 : i32
    %c0_i32_0 = arith.constant 0 : i32
    %c0_i32_1 = arith.constant 0 : i32
    return %c0_i32, %c0_i32_0 : i32, i32
  }
  func.func @transform_9(%arg0: i32) -> (i32, i32) {
    %c0_i32 = arith.constant 0 : i32
    %c0_i32_0 = arith.constant 0 : i32
    return %c0_i32, %arg0 : i32, i32
  }
}

</mosaic_0001>

<llo_original>
// kernel: tpu_custom_call.1
$region0: #{tpu_custom_call.1}
  #allocation0 [shape = 'u32[]', space=smem, size = 0x4, offset = 0x4, fixed_abs, tag = 'smem constant byte address 0x4 - core index']
  #allocation1 [shape = 'u32[144,128]{1,0:T(1,128)}', space=vmem, size = 0x12000, scoped, tag = 'internal scratch']
  %s0 = inlined_call_operand.vmem [shape: f32[4,128], index: 0, kind: input, shape index: {}]
  %s1 = inlined_call_operand.vmem [shape: f32[128,4], index: 1, kind: input, shape index: {}]
  %s2 = inlined_call_operand.vmem [shape: f32[128,1], index: 2, kind: input, shape index: {}]
  %s3 = inlined_call_operand.vmem [shape: f32[64,128], index: 3, kind: input, shape index: {}]
  %s4 = inlined_call_operand.vmem [shape: f32[64,1], index: 4, kind: input, shape index: {}]
  %s5 = inlined_call_operand.vmem [shape: f32[64,64], index: 5, kind: input, shape index: {}]
  %s6 = inlined_call_operand.vmem [shape: f32[64,1], index: 6, kind: input, shape index: {}]
  %s7 = inlined_call_operand.vmem [shape: f32[2,64], index: 7, kind: input, shape index: {}]
  %s8 = inlined_call_operand.vmem [shape: f32[2,1], index: 8, kind: input, shape index: {}]
  %s9 = inlined_call_operand.hbm [shape: f32[2,128], index: 9, kind: output, shape index: {}]
  %s10 = sld [smem:[#allocation0]]
  $region46: #{tpu_custom_call.1} parent=0
    _
  %s12 = ssub.s32 1, %s10
  %s13 = scalar_select 0, %s12, %s10
  $region1: #{tpu_custom_call.1} parent=0
    #allocation2 [shape = 'u8[1024]{0}', space=vmem, size = 0x400, scoped, tag = 'output window, operand 0, single buffered']
    #allocation3 [shape = 's32[1]{0}', space=sflag, size = 0x4, scoped, tag = 'scoped memory for tpu_custom_call.1']
    %14 = vsyncpa [#allocation3], 0
    // Predicated region
    $region2: #{tpu_custom_call.1} parent=1 // pred_check
      _
    $region3: #{tpu_custom_call.1} parent=1 // pred_check_branch
      %16 = sbr.rel (0) target = $region5
    $region4: #{tpu_custom_call.1} parent=1 // pred_region
      _
    $region5: #{tpu_custom_call.1} parent=1 // pred_fallthru
      _
    // Predicated region
    $region6: #{tpu_custom_call.1} parent=1 // pred_check
      _
    $region7: #{tpu_custom_call.1} parent=1 // pred_check_branch
      %18 = sbr.rel (0) target = $region9
    $region8: #{tpu_custom_call.1} parent=1 // pred_region
      _
    $region9: #{tpu_custom_call.1} parent=1 // pred_fallthru
      _
    // Predicated region
    $region10: #{tpu_custom_call.1} parent=1 // pred_check
      _
    $region11: #{tpu_custom_call.1} parent=1 // pred_check_branch
      %20 = sbr.rel (0) target = $region13
    $region12: #{tpu_custom_call.1} parent=1 // pred_region
      _
    $region13: #{tpu_custom_call.1} parent=1 // pred_fallthru
      _
    // Predicated region
    $region14: #{tpu_custom_call.1} parent=1 // pred_check
      _
    $region15: #{tpu_custom_call.1} parent=1 // pred_check_branch
      %22 = sbr.rel (0) target = $region17
    $region16: #{tpu_custom_call.1} parent=1 // pred_region
      _
    $region17: #{tpu_custom_call.1} parent=1 // pred_fallthru
      _
    // Predicated region
    $region18: #{tpu_custom_call.1} parent=1 // pred_check
      _
    $region19: #{tpu_custom_call.1} parent=1 // pred_check_branch
      %24 = sbr.rel (0) target = $region21
    $region20: #{tpu_custom_call.1} parent=1 // pred_region
      _
    $region21: #{tpu_custom_call.1} parent=1 // pred_fallthru
      _
    // Predicated region
    $region22: #{tpu_custom_call.1} parent=1 // pred_check
      _
    $region23: #{tpu_custom_call.1} parent=1 // pred_check_branch
      %26 = sbr.rel (0) target = $region25
    $region24: #{tpu_custom_call.1} parent=1 // pred_region
      _
    $region25: #{tpu_custom_call.1} parent=1 // pred_fallthru
      _
    // Predicated region
    $region26: #{tpu_custom_call.1} parent=1 // pred_check
      _
    $region27: #{tpu_custom_call.1} parent=1 // pred_check_branch
      %28 = sbr.rel (0) target = $region29
    $region28: #{tpu_custom_call.1} parent=1 // pred_region
      _
    $region29: #{tpu_custom_call.1} parent=1 // pred_fallthru
      _
    // Predicated region
    $region30: #{tpu_custom_call.1} parent=1 // pred_check
      _
    $region31: #{tpu_custom_call.1} parent=1 // pred_check_branch
      %30 = sbr.rel (0) target = $region33
    $region32: #{tpu_custom_call.1} parent=1 // pred_region
      _
    $region33: #{tpu_custom_call.1} parent=1 // pred_fallthru
      _
    // Predicated region
    $region34: #{tpu_custom_call.1} parent=1 // pred_check
      _
    $region35: #{tpu_custom_call.1} parent=1 // pred_check_branch
      %32 = sbr.rel (0) target = $region37
    $region36: #{tpu_custom_call.1} parent=1 // pred_region
      _
    $region37: #{tpu_custom_call.1} parent=1 // pred_fallthru
      _
    %v33 = vld [vmem:[%s0] sm:$0xf]
    %v34 = vld [vmem:[%s1] sm:$0xff]
    %v35 = vld [vmem:[%s1 + $0x8] sm:$0xff]
    %v36 = vld [vmem:[%s1 + $0x10] sm:$0xff]
    %v37 = vld [vmem:[%s1 + $0x18] sm:$0xff]
    %v38 = vld [vmem:[%s1 + $0x20] sm:$0xff]
    %v39 = vld [vmem:[%s1 + $0x28] sm:$0xff]
    %v40 = vld [vmem:[%s1 + $0x30] sm:$0xff]
    %v41 = vld [vmem:[%s1 + $0x38] sm:$0xff]
    %v42 = vld [vmem:[%s1 + $0x40] sm:$0xff]
    %v43 = vld [vmem:[%s1 + $0x48] sm:$0xff]
    %v44 = vld [vmem:[%s1 + $0x50] sm:$0xff]
    %v45 = vld [vmem:[%s1 + $0x58] sm:$0xff]
    %v46 = vld [vmem:[%s1 + $0x60] sm:$0xff]
    %v47 = vld [vmem:[%s1 + $0x68] sm:$0xff]
    %v48 = vld [vmem:[%s1 + $0x70] sm:$0xff]
    %v49 = vld [vmem:[%s1 + $0x78] sm:$0xff]
    %v50 = vld [vmem:[%s2] sm:$0xff]
    %v51 = vld [vmem:[%s2 + $0x8] sm:$0xff]
    %v52 = vld [vmem:[%s2 + $0x10] sm:$0xff]
    %v53 = vld [vmem:[%s2 + $0x18] sm:$0xff]
    %v54 = vld [vmem:[%s2 + $0x20] sm:$0xff]
    %v55 = vld [vmem:[%s2 + $0x28] sm:$0xff]
    %v56 = vld [vmem:[%s2 + $0x30] sm:$0xff]
    %v57 = vld [vmem:[%s2 + $0x38] sm:$0xff]
    %v58 = vld [vmem:[%s2 + $0x40] sm:$0xff]
    %v59 = vld [vmem:[%s2 + $0x48] sm:$0xff]
    %v60 = vld [vmem:[%s2 + $0x50] sm:$0xff]
    %v61 = vld [vmem:[%s2 + $0x58] sm:$0xff]
    %v62 = vld [vmem:[%s2 + $0x60] sm:$0xff]
    %v63 = vld [vmem:[%s2 + $0x68] sm:$0xff]
    %v64 = vld [vmem:[%s2 + $0x70] sm:$0xff]
    %v65 = vld [vmem:[%s2 + $0x78] sm:$0xff]
    %67 = vset.pattern.permute.xlu0 0
    %68 = vperm.xlu0 %67, %v50
    %v69 = vpop.permute.xlu0 %68
    %72 = vset.pattern.permute.xlu0 0
    %73 = vperm.xlu0 %72, %v51
    %v74 = vpop.permute.xlu0 %73
    %77 = vset.pattern.permute.xlu0 0
    %78 = vperm.xlu0 %77, %v52
    %v79 = vpop.permute.xlu0 %78
    %82 = vset.pattern.permute.xlu0 0
    %83 = vperm.xlu0 %82, %v53
    %v84 = vpop.permute.xlu0 %83
    %87 = vset.pattern.permute.xlu0 0
    %88 = vperm.xlu0 %87, %v54
    %v89 = vpop.permute.xlu0 %88
    %92 = vset.pattern.permute.xlu0 0
    %93 = vperm.xlu0 %92, %v55
    %v94 = vpop.permute.xlu0 %93
    %97 = vset.pattern.permute.xlu0 0
    %98 = vperm.xlu0 %97, %v56
    %v99 = vpop.permute.xlu0 %98
    %102 = vset.pattern.permute.xlu0 0
    %103 = vperm.xlu0 %102, %v57
    %v104 = vpop.permute.xlu0 %103
    %107 = vset.pattern.permute.xlu0 0
    %108 = vperm.xlu0 %107, %v58
    %v109 = vpop.permute.xlu0 %108
    %112 = vset.pattern.permute.xlu0 0
    %113 = vperm.xlu0 %112, %v59
    %v114 = vpop.permute.xlu0 %113
    %117 = vset.pattern.permute.xlu0 0
    %118 = vperm.xlu0 %117, %v60
    %v119 = vpop.permute.xlu0 %118
    %122 = vset.pattern.permute.xlu0 0
    %123 = vperm.xlu0 %122, %v61
    %v124 = vpop.permute.xlu0 %123
    %127 = vset.pattern.permute.xlu0 0
    %128 = vperm.xlu0 %127, %v62
    %v129 = vpop.permute.xlu0 %128
    %132 = vset.pattern.permute.xlu0 0
    %133 = vperm.xlu0 %132, %v63
    %v134 = vpop.permute.xlu0 %133
    %137 = vset.pattern.permute.xlu0 0
    %138 = vperm.xlu0 %137, %v64
    %v139 = vpop.permute.xlu0 %138
    %142 = vset.pattern.permute.xlu0 0
    %143 = vperm.xlu0 %142, %v65
    %v144 = vpop.permute.xlu0 %143
    %vm146 = vcmask 31744
    %v148 = vsel %vm146, %v34, 0
    %v151 = vsel %vm146, %v35, 0
    %v154 = vsel %vm146, %v36, 0
    %v157 = vsel %vm146, %v37, 0
    %v160 = vsel %vm146, %v38, 0
    %v163 = vsel %vm146, %v39, 0
    %v166 = vsel %vm146, %v40, 0
    %v169 = vsel %vm146, %v41, 0
    %v172 = vsel %vm146, %v42, 0
    %v175 = vsel %vm146, %v43, 0
    %v178 = vsel %vm146, %v44, 0
    %v181 = vsel %vm146, %v45, 0
    %v184 = vsel %vm146, %v46, 0
    %v187 = vsel %vm146, %v47, 0
    %v190 = vsel %vm146, %v48, 0
    %v193 = vsel %vm146, %v49, 0
    %vm195 = vcmask 1043456
    %v197 = vsel %vm195, %v33, 0
    %199 = vmatprep.subr.mxu0 0.0
    %200 = vmatpush1.msra.mxu0 %v197
    %201 = vmatprep.subr.mxu0 0.0
    %202 = vmatpush1.msra.mxu0 0.0
    %203 = vmatprep.subr.mxu0 0.0
    %204 = vmatpush1.msra.mxu0 0.0
    %205 = vmatprep.subr.mxu0 0.0
    %206 = vmatpush1.msra.mxu0 0.0
    %207 = vmatprep.subr.mxu0 0.0
    %208 = vmatpush1.msra.mxu0 0.0
    %209 = vmatprep.subr.mxu0 0.0
    %210 = vmatpush1.msra.mxu0 0.0
    %211 = vmatprep.subr.mxu0 0.0
    %212 = vmatpush1.msra.mxu0 0.0
    %213 = vmatprep.subr.mxu0 0.0
    %214 = vmatpush1.msra.mxu0 0.0
    %215 = vmatprep.subr.mxu0 0.0
    %216 = vmatpush1.msra.mxu0 0.0
    %217 = vmatprep.subr.mxu0 0.0
    %218 = vmatpush1.msra.mxu0 0.0
    %219 = vmatprep.subr.mxu0 0.0
    %220 = vmatpush1.msra.mxu0 0.0
    %221 = vmatprep.subr.mxu0 0.0
    %222 = vmatpush1.msra.mxu0 0.0
    %223 = vmatprep.subr.mxu0 0.0
    %224 = vmatpush1.msra.mxu0 0.0
    %225 = vmatprep.subr.mxu0 0.0
    %226 = vmatpush1.msra.mxu0 0.0
    %227 = vmatprep.subr.mxu0 0.0
    %228 = vmatpush1.msra.mxu0 0.0
    %229 = vmatprep.subr.mxu0 0.0
    %230 = vmatpush1.msra.mxu0 0.0
    %231 = vmatprep.subr.mxu0 0.0
    %232 = vmatpush1.msra.mxu0 0.0
    %233 = vmatprep.subr.mxu0 0.0
    %234 = vmatpush1.msra.mxu0 0.0
    %235 = vmatprep.subr.mxu0 0.0
    %236 = vmatpush1.msra.mxu0 0.0
    %237 = vmatprep.subr.mxu0 0.0
    %238 = vmatpush1.msra.mxu0 0.0
    %239 = vmatprep.subr.mxu0 0.0
    %240 = vmatpush1.msra.mxu0 0.0
    %241 = vmatprep.subr.mxu0 0.0
    %242 = vmatpush1.msra.mxu0 0.0
    %243 = vmatprep.subr.mxu0 0.0
    %244 = vmatpush1.msra.mxu0 0.0
    %245 = vmatprep.subr.mxu0 0.0
    %246 = vmatpush1.msra.mxu0 0.0
    %247 = vmatprep.subr.mxu0 0.0
    %248 = vmatpush1.msra.mxu0 0.0
    %249 = vmatprep.subr.mxu0 0.0
    %250 = vmatpush1.msra.mxu0 0.0
    %251 = vmatprep.subr.mxu0 0.0
    %252 = vmatpush1.msra.mxu0 0.0
    %253 = vmatprep.subr.mxu0 0.0
    %254 = vmatpush1.msra.mxu0 0.0
    %255 = vmatprep.subr.mxu0 0.0
    %256 = vmatpush1.msra.mxu0 0.0
    %257 = vmatprep.subr.mxu0 0.0
    %258 = vmatpush1.msra.mxu0 0.0
    %259 = vmatprep.subr.mxu0 0.0
    %260 = vmatpush1.msra.mxu0 0.0
    %261 = vmatprep.subr.mxu0 0.0
    %262 = vmatpush1.msra.mxu0 0.0
    %263 = vmatprep.mubr.f32.mxu0 0.0
    %264 = vmatmul.mubr.f32.gmra.mrb[0].mxu0 %v148
    %v265 = vpop.f32.mrb[0].mxu0
    %v266 = vadd.f32 %v69, %v265
    %v267 = vpop.f32.mrb[0].mxu0
    %268 = vmatprep.mubr.f32.mxu0 0.0
    %269 = vmatmul.mubr.f32.gmra.mrb[0].mxu0 %v151
    %v270 = vpop.f32.mrb[0].mxu0
    %v271 = vadd.f32 %v74, %v270
    %v272 = vpop.f32.mrb[0].mxu0
    %273 = vmatprep.mubr.f32.mxu0 0.0
    %274 = vmatmul.mubr.f32.gmra.mrb[0].mxu0 %v154
    %v275 = vpop.f32.mrb[0].mxu0
    %v276 = vadd.f32 %v79, %v275
    %v277 = vpop.f32.mrb[0].mxu0
    %278 = vmatprep.mubr.f32.mxu0 0.0
    %279 = vmatmul.mubr.f32.gmra.mrb[0].mxu0 %v157
    %v280 = vpop.f32.mrb[0].mxu0
    %v281 = vadd.f32 %v84, %v280
    %v282 = vpop.f32.mrb[0].mxu0
    %283 = vmatprep.mubr.f32.mxu0 0.0
    %284 = vmatmul.mubr.f32.gmra.mrb[0].mxu0 %v160
    %v285 = vpop.f32.mrb[0].mxu0
    %v286 = vadd.f32 %v89, %v285
    %v287 = vpop.f32.mrb[0].mxu0
    %288 = vmatprep.mubr.f32.mxu0 0.0
    %289 = vmatmul.mubr.f32.gmra.mrb[0].mxu0 %v163
    %v290 = vpop.f32.mrb[0].mxu0
    %v291 = vadd.f32 %v94, %v290
    %v292 = vpop.f32.mrb[0].mxu0
    %293 = vmatprep.mubr.f32.mxu0 0.0
    %294 = vmatmul.mubr.f32.gmra.mrb[0].mxu0 %v166
    %v295 = vpop.f32.mrb[0].mxu0
    %v296 = vadd.f32 %v99, %v295
    %v297 = vpop.f32.mrb[0].mxu0
    %298 = vmatprep.mubr.f32.mxu0 0.0
    %299 = vmatmul.mubr.f32.gmra.mrb[0].mxu0 %v169
    %v300 = vpop.f32.mrb[0].mxu0
    %v301 = vadd.f32 %v104, %v300
    %v302 = vpop.f32.mrb[0].mxu0
    %303 = vmatprep.mubr.f32.mxu0 0.0
    %304 = vmatmul.mubr.f32.gmra.mrb[0].mxu0 %v172
    %v305 = vpop.f32.mrb[0].mxu0
    %v306 = vadd.f32 %v109, %v305
    %v307 = vpop.f32.mrb[0].mxu0
    %308 = vmatprep.mubr.f32.mxu0 0.0
    %309 = vmatmul.mubr.f32.gmra.mrb[0].mxu0 %v175
    %v310 = vpop.f32.mrb[0].mxu0
    %v311 = vadd.f32 %v114, %v310
    %v312 = vpop.f32.mrb[0].mxu0
    %313 = vmatprep.mubr.f32.mxu0 0.0
    %314 = vmatmul.mubr.f32.gmra.mrb[0].mxu0 %v178
    %v315 = vpop.f32.mrb[0].mxu0
    %v316 = vadd.f32 %v119, %v315
    %v317 = vpop.f32.mrb[0].mxu0
    %318 = vmatprep.mubr.f32.mxu0 0.0
    %319 = vmatmul.mubr.f32.gmra.mrb[0].mxu0 %v181
    %v320 = vpop.f32.mrb[0].mxu0
    %v321 = vadd.f32 %v124, %v320
    %v322 = vpop.f32.mrb[0].mxu0
    %323 = vmatprep.mubr.f32.mxu0 0.0
    %324 = vmatmul.mubr.f32.gmra.mrb[0].mxu0 %v184
    %v325 = vpop.f32.mrb[0].mxu0
    %v326 = vadd.f32 %v129, %v325
    %v327 = vpop.f32.mrb[0].mxu0
    %328 = vmatprep.mubr.f32.mxu0 0.0
    %329 = vmatmul.mubr.f32.gmra.mrb[0].mxu0 %v187
    %v330 = vpop.f32.mrb[0].mxu0
    %v331 = vadd.f32 %v134, %v330
    %v332 = vpop.f32.mrb[0].mxu0
    %333 = vmatprep.mubr.f32.mxu0 0.0
    %334 = vmatmul.mubr.f32.gmra.mrb[0].mxu0 %v190
    %v335 = vpop.f32.mrb[0].mxu0
    %v336 = vadd.f32 %v139, %v335
    %v337 = vpop.f32.mrb[0].mxu0
    %338 = vmatprep.mubr.f32.mxu0 0.0
    %339 = vmatmul.mubr.f32.gmra.mrb[0].mxu0 %v193
    %v340 = vpop.f32.mrb[0].mxu0
    %v341 = vadd.f32 %v144, %v340
    %v342 = vpop.f32.mrb[0].mxu0
    %343 = vdwg.mxu0
    %v344 = vmax.f32 %v266, 0.0
    %v345 = vmax.f32 %v271, 0.0
    %v346 = vmax.f32 %v276, 0.0
    %v347 = vmax.f32 %v281, 0.0
    %v348 = vmax.f32 %v286, 0.0
    %v349 = vmax.f32 %v291, 0.0
    %v350 = vmax.f32 %v296, 0.0
    %v351 = vmax.f32 %v301, 0.0
    %v352 = vmax.f32 %v306, 0.0
    %v353 = vmax.f32 %v311, 0.0
    %v354 = vmax.f32 %v316, 0.0
    %v355 = vmax.f32 %v321, 0.0
    %v356 = vmax.f32 %v326, 0.0
    %v357 = vmax.f32 %v331, 0.0
    %v358 = vmax.f32 %v336, 0.0
    %v359 = vmax.f32 %v341, 0.0
    %v360 = vld [vmem:[%s3] sm:$0xff]
    %v361 = vld [vmem:[%s3 + $0x8] sm:$0xff]
    %v362 = vld [vmem:[%s3 + $0x10] sm:$0xff]
    %v363 = vld [vmem:[%s3 + $0x18] sm:$0xff]
    %v364 = vld [vmem:[%s3 + $0x20] sm:$0xff]
    %v365 = vld [vmem:[%s3 + $0x28] sm:$0xff]
    %v366 = vld [vmem:[%s3 + $0x30] sm:$0xff]
    %v367 = vld [vmem:[%s3 + $0x38] sm:$0xff]
    %v368 = vld [vmem:[%s4] sm:$0xff]
    %v369 = vld [vmem:[%s4 + $0x8] sm:$0xff]
    %v370 = vld [vmem:[%s4 + $0x10] sm:$0xff]
    %v371 = vld [vmem:[%s4 + $0x18] sm:$0xff]
    %v372 = vld [vmem:[%s4 + $0x20] sm:$0xff]
    %v373 = vld [vmem:[%s4 + $0x28] sm:$0xff]
    %v374 = vld [vmem:[%s4 + $0x30] sm:$0xff]
    %v375 = vld [vmem:[%s4 + $0x38] sm:$0xff]
    %377 = vset.pattern.permute.xlu0 0
    %378 = vperm.xlu0 %377, %v368
    %v379 = vpop.permute.xlu0 %378
    %382 = vset.pattern.permute.xlu0 0
    %383 = vperm.xlu0 %382, %v369
    %v384 = vpop.permute.xlu0 %383
    %387 = vset.pattern.permute.xlu0 0
    %388 = vperm.xlu0 %387, %v370
    %v389 = vpop.permute.xlu0 %388
    %392 = vset.pattern.permute.xlu0 0
    %393 = vperm.xlu0 %392, %v371
    %v394 = vpop.permute.xlu0 %393
    %397 = vset.pattern.permute.xlu0 0
    %398 = vperm.xlu0 %397, %v372
    %v399 = vpop.permute.xlu0 %398
    %402 = vset.pattern.permute.xlu0 0
    %403 = vperm.xlu0 %402, %v373
    %v404 = vpop.permute.xlu0 %403
    %407 = vset.pattern.permute.xlu0 0
    %408 = vperm.xlu0 %407, %v374
    %v409 = vpop.permute.xlu0 %408
    %412 = vset.pattern.permute.xlu0 0
    %413 = vperm.xlu0 %412, %v375
    %v414 = vpop.permute.xlu0 %413
    %416 = vmatprep.subr.mxu0 0.0
    %417 = vmatpush1.msra.mxu0 %v344
    %418 = vmatprep.subr.mxu0 0.0
    %419 = vmatpush1.msra.mxu0 %v345
    %420 = vmatprep.subr.mxu0 0.0
    %421 = vmatpush1.msra.mxu0 %v346
    %422 = vmatprep.subr.mxu0 0.0
    %423 = vmatpush1.msra.mxu0 %v347
    %424 = vmatprep.subr.mxu0 0.0
    %425 = vmatpush1.msra.mxu0 %v348
    %426 = vmatprep.subr.mxu0 0.0
    %427 = vmatpush1.msra.mxu0 %v349
    %428 = vmatprep.subr.mxu0 0.0
    %429 = vmatpush1.msra.mxu0 %v350
    %430 = vmatprep.subr.mxu0 0.0
    %431 = vmatpush1.msra.mxu0 %v351
    %432 = vmatprep.subr.mxu0 0.0
    %433 = vmatpush1.msra.mxu0 %v352
    %434 = vmatprep.subr.mxu0 0.0
    %435 = vmatpush1.msra.mxu0 %v353
    %436 = vmatprep.subr.mxu0 0.0
    %437 = vmatpush1.msra.mxu0 %v354
    %438 = vmatprep.subr.mxu0 0.0
    %439 = vmatpush1.msra.mxu0 %v355
    %440 = vmatprep.subr.mxu0 0.0
    %441 = vmatpush1.msra.mxu0 %v356
    %442 = vmatprep.subr.mxu0 0.0
    %443 = vmatpush1.msra.mxu0 %v357
    %444 = vmatprep.subr.mxu0 0.0
    %445 = vmatpush1.msra.mxu0 %v358
    %446 = vmatprep.subr.mxu0 0.0
    %447 = vmatpush1.msra.mxu0 %v359
    %448 = vmatprep.subr.mxu0 0.0
    %449 = vmatpush1.msra.mxu0 0.0
    %450 = vmatprep.subr.mxu0 0.0
    %451 = vmatpush1.msra.mxu0 0.0
    %452 = vmatprep.subr.mxu0 0.0
    %453 = vmatpush1.msra.mxu0 0.0
    %454 = vmatprep.subr.mxu0 0.0
    %455 = vmatpush1.msra.mxu0 0.0
    %456 = vmatprep.subr.mxu0 0.0
    %457 = vmatpush1.msra.mxu0 0.0
    %458 = vmatprep.subr.mxu0 0.0
    %459 = vmatpush1.msra.mxu0 0.0
    %460 = vmatprep.subr.mxu0 0.0
    %461 = vmatpush1.msra.mxu0 0.0
    %462 = vmatprep.subr.mxu0 0.0
    %463 = vmatpush1.msra.mxu0 0.0
    %464 = vmatprep.subr.mxu0 0.0
    %465 = vmatpush1.msra.mxu0 0.0
    %466 = vmatprep.subr.mxu0 0.0
    %467 = vmatpush1.msra.mxu0 0.0
    %468 = vmatprep.subr.mxu0 0.0
    %469 = vmatpush1.msra.mxu0 0.0
    %470 = vmatprep.subr.mxu0 0.0
    %471 = vmatpush1.msra.mxu0 0.0
    %472 = vmatprep.subr.mxu0 0.0
    %473 = vmatpush1.msra.mxu0 0.0
    %474 = vmatprep.subr.mxu0 0.0
    %475 = vmatpush1.msra.mxu0 0.0
    %476 = vmatprep.subr.mxu0 0.0
    %477 = vmatpush1.msra.mxu0 0.0
    %478 = vmatprep.subr.mxu0 0.0
    %479 = vmatpush1.msra.mxu0 0.0
    %480 = vmatprep.mubr.f32.mxu0 0.0
    %481 = vmatmul.mubr.f32.gmra.mrb[0].mxu0 %v360
    %v482 = vpop.f32.mrb[0].mxu0
    %v483 = vadd.f32 %v379, %v482
    %v484 = vpop.f32.mrb[0].mxu0
    %485 = vmatprep.mubr.f32.mxu0 0.0
    %486 = vmatmul.mubr.f32.gmra.mrb[0].mxu0 %v361
    %v487 = vpop.f32.mrb[0].mxu0
    %v488 = vadd.f32 %v384, %v487
    %v489 = vpop.f32.mrb[0].mxu0
    %490 = vmatprep.mubr.f32.mxu0 0.0
    %491 = vmatmul.mubr.f32.gmra.mrb[0].mxu0 %v362
    %v492 = vpop.f32.mrb[0].mxu0
    %v493 = vadd.f32 %v389, %v492
    %v494 = vpop.f32.mrb[0].mxu0
    %495 = vmatprep.mubr.f32.mxu0 0.0
    %496 = vmatmul.mubr.f32.gmra.mrb[0].mxu0 %v363
    %v497 = vpop.f32.mrb[0].mxu0
    %v498 = vadd.f32 %v394, %v497
    %v499 = vpop.f32.mrb[0].mxu0
    %500 = vmatprep.mubr.f32.mxu0 0.0
    %501 = vmatmul.mubr.f32.gmra.mrb[0].mxu0 %v364
    %v502 = vpop.f32.mrb[0].mxu0
    %v503 = vadd.f32 %v399, %v502
    %v504 = vpop.f32.mrb[0].mxu0
    %505 = vmatprep.mubr.f32.mxu0 0.0
    %506 = vmatmul.mubr.f32.gmra.mrb[0].mxu0 %v365
    %v507 = vpop.f32.mrb[0].mxu0
    %v508 = vadd.f32 %v404, %v507
    %v509 = vpop.f32.mrb[0].mxu0
    %510 = vmatprep.mubr.f32.mxu0 0.0
    %511 = vmatmul.mubr.f32.gmra.mrb[0].mxu0 %v366
    %v512 = vpop.f32.mrb[0].mxu0
    %v513 = vadd.f32 %v409, %v512
    %v514 = vpop.f32.mrb[0].mxu0
    %515 = vmatprep.mubr.f32.mxu0 0.0
    %516 = vmatmul.mubr.f32.gmra.mrb[0].mxu0 %v367
    %v517 = vpop.f32.mrb[0].mxu0
    %v518 = vadd.f32 %v414, %v517
    %v519 = vpop.f32.mrb[0].mxu0
    %520 = vdwg.mxu0
    %v521 = vmax.f32 %v483, 0.0
    %v522 = vmax.f32 %v488, 0.0
    %v523 = vmax.f32 %v493, 0.0
    %v524 = vmax.f32 %v498, 0.0
    %v525 = vmax.f32 %v503, 0.0
    %v526 = vmax.f32 %v508, 0.0
    %v527 = vmax.f32 %v513, 0.0
    %v528 = vmax.f32 %v518, 0.0
    %v529 = vld [vmem:[%s5] sm:$0xff]
    %v530 = vld [vmem:[%s5 + $0x8] sm:$0xff]
    %v531 = vld [vmem:[%s5 + $0x10] sm:$0xff]
    %v532 = vld [vmem:[%s5 + $0x18] sm:$0xff]
    %v533 = vld [vmem:[%s5 + $0x20] sm:$0xff]
    %v534 = vld [vmem:[%s5 + $0x28] sm:$0xff]
    %v535 = vld [vmem:[%s5 + $0x30] sm:$0xff]
    %v536 = vld [vmem:[%s5 + $0x38] sm:$0xff]
    %v537 = vld [vmem:[%s6] sm:$0xff]
    %v538 = vld [vmem:[%s6 + $0x8] sm:$0xff]
    %v539 = vld [vmem:[%s6 + $0x10] sm:$0xff]
    %v540 = vld [vmem:[%s6 + $0x18] sm:$0xff]
    %v541 = vld [vmem:[%s6 + $0x20] sm:$0xff]
    %v542 = vld [vmem:[%s6 + $0x28] sm:$0xff]
    %v543 = vld [vmem:[%s6 + $0x30] sm:$0xff]
    %v544 = vld [vmem:[%s6 + $0x38] sm:$0xff]
    %546 = vset.pattern.permute.xlu0 0
    %547 = vperm.xlu0 %546, %v537
    %v548 = vpop.permute.xlu0 %547
    %551 = vset.pattern.permute.xlu0 0
    %552 = vperm.xlu0 %551, %v538
    %v553 = vpop.permute.xlu0 %552
    %556 = vset.pattern.permute.xlu0 0
    %557 = vperm.xlu0 %556, %v539
    %v558 = vpop.permute.xlu0 %557
    %561 = vset.pattern.permute.xlu0 0
    %562 = vperm.xlu0 %561, %v540
    %v563 = vpop.permute.xlu0 %562
    %566 = vset.pattern.permute.xlu0 0
    %567 = vperm.xlu0 %566, %v541
    %v568 = vpop.permute.xlu0 %567
    %571 = vset.pattern.permute.xlu0 0
    %572 = vperm.xlu0 %571, %v542
    %v573 = vpop.permute.xlu0 %572
    %576 = vset.pattern.permute.xlu0 0
    %577 = vperm.xlu0 %576, %v543
    %v578 = vpop.permute.xlu0 %577
    %581 = vset.pattern.permute.xlu0 0
    %582 = vperm.xlu0 %581, %v544
    %v583 = vpop.permute.xlu0 %582
    %vm585 = vcmask 523264
    %v587 = vsel %vm585, %v529, 0
    %v590 = vsel %vm585, %v530, 0
    %v593 = vsel %vm585, %v531, 0
    %v596 = vsel %vm585, %v532, 0
    %v599 = vsel %vm585, %v533, 0
    %v602 = vsel %vm585, %v534, 0
    %v605 = vsel %vm585, %v535, 0
    %v608 = vsel %vm585, %v536, 0
    %610 = vmatprep.subr.mxu0 0.0
    %611 = vmatpush1.msra.mxu0 %v521
    %612 = vmatprep.subr.mxu0 0.0
    %613 = vmatpush1.msra.mxu0 %v522
    %614 = vmatprep.subr.mxu0 0.0
    %615 = vmatpush1.msra.mxu0 %v523
    %616 = vmatprep.subr.mxu0 0.0
    %617 = vmatpush1.msra.mxu0 %v524
    %618 = vmatprep.subr.mxu0 0.0
    %619 = vmatpush1.msra.mxu0 %v525
    %620 = vmatprep.subr.mxu0 0.0
    %621 = vmatpush1.msra.mxu0 %v526
    %622 = vmatprep.subr.mxu0 0.0
    %623 = vmatpush1.msra.mxu0 %v527
    %624 = vmatprep.subr.mxu0 0.0
    %625 = vmatpush1.msra.mxu0 %v528
    %626 = vmatprep.subr.mxu0 0.0
    %627 = vmatpush1.msra.mxu0 0.0
    %628 = vmatprep.subr.mxu0 0.0
    %629 = vmatpush1.msra.mxu0 0.0
    %630 = vmatprep.subr.mxu0 0.0
    %631 = vmatpush1.msra.mxu0 0.0
    %632 = vmatprep.subr.mxu0 0.0
    %633 = vmatpush1.msra.mxu0 0.0
    %634 = vmatprep.subr.mxu0 0.0
    %635 = vmatpush1.msra.mxu0 0.0
    %636 = vmatprep.subr.mxu0 0.0
    %637 = vmatpush1.msra.mxu0 0.0
    %638 = vmatprep.subr.mxu0 0.0
    %639 = vmatpush1.msra.mxu0 0.0
    %640 = vmatprep.subr.mxu0 0.0
    %641 = vmatpush1.msra.mxu0 0.0
    %642 = vmatprep.subr.mxu0 0.0
    %643 = vmatpush1.msra.mxu0 0.0
    %644 = vmatprep.subr.mxu0 0.0
    %645 = vmatpush1.msra.mxu0 0.0
    %646 = vmatprep.subr.mxu0 0.0
    %647 = vmatpush1.msra.mxu0 0.0
    %648 = vmatprep.subr.mxu0 0.0
    %649 = vmatpush1.msra.mxu0 0.0
    %650 = vmatprep.subr.mxu0 0.0
    %651 = vmatpush1.msra.mxu0 0.0
    %652 = vmatprep.subr.mxu0 0.0
    %653 = vmatpush1.msra.mxu0 0.0
    %654 = vmatprep.subr.mxu0 0.0
    %655 = vmatpush1.msra.mxu0 0.0
    %656 = vmatprep.subr.mxu0 0.0
    %657 = vmatpush1.msra.mxu0 0.0
    %658 = vmatprep.subr.mxu0 0.0
    %659 = vmatpush1.msra.mxu0 0.0
    %660 = vmatprep.subr.mxu0 0.0
    %661 = vmatpush1.msra.mxu0 0.0
    %662 = vmatprep.subr.mxu0 0.0
    %663 = vmatpush1.msra.mxu0 0.0
    %664 = vmatprep.subr.mxu0 0.0
    %665 = vmatpush1.msra.mxu0 0.0
    %666 = vmatprep.subr.mxu0 0.0
    %667 = vmatpush1.msra.mxu0 0.0
    %668 = vmatprep.subr.mxu0 0.0
    %669 = vmatpush1.msra.mxu0 0.0
    %670 = vmatprep.subr.mxu0 0.0
    %671 = vmatpush1.msra.mxu0 0.0
    %672 = vmatprep.subr.mxu0 0.0
    %673 = vmatpush1.msra.mxu0 0.0
    %674 = vmatprep.mubr.f32.mxu0 0.0
    %675 = vmatmul.mubr.f32.gmra.mrb[0].mxu0 %v587
    %v676 = vpop.f32.mrb[0].mxu0
    %v677 = vadd.f32 %v548, %v676
    %v678 = vpop.f32.mrb[0].mxu0
    %679 = vmatprep.mubr.f32.mxu0 0.0
    %680 = vmatmul.mubr.f32.gmra.mrb[0].mxu0 %v590
    %v681 = vpop.f32.mrb[0].mxu0
    %v682 = vadd.f32 %v553, %v681
    %v683 = vpop.f32.mrb[0].mxu0
    %684 = vmatprep.mubr.f32.mxu0 0.0
    %685 = vmatmul.mubr.f32.gmra.mrb[0].mxu0 %v593
    %v686 = vpop.f32.mrb[0].mxu0
    %v687 = vadd.f32 %v558, %v686
    %v688 = vpop.f32.mrb[0].mxu0
    %689 = vmatprep.mubr.f32.mxu0 0.0
    %690 = vmatmul.mubr.f32.gmra.mrb[0].mxu0 %v596
    %v691 = vpop.f32.mrb[0].mxu0
    %v692 = vadd.f32 %v563, %v691
    %v693 = vpop.f32.mrb[0].mxu0
    %694 = vmatprep.mubr.f32.mxu0 0.0
    %695 = vmatmul.mubr.f32.gmra.mrb[0].mxu0 %v599
    %v696 = vpop.f32.mrb[0].mxu0
    %v697 = vadd.f32 %v568, %v696
    %v698 = vpop.f32.mrb[0].mxu0
    %699 = vmatprep.mubr.f32.mxu0 0.0
    %700 = vmatmul.mubr.f32.gmra.mrb[0].mxu0 %v602
    %v701 = vpop.f32.mrb[0].mxu0
    %v702 = vadd.f32 %v573, %v701
    %v703 = vpop.f32.mrb[0].mxu0
    %704 = vmatprep.mubr.f32.mxu0 0.0
    %705 = vmatmul.mubr.f32.gmra.mrb[0].mxu0 %v605
    %v706 = vpop.f32.mrb[0].mxu0
    %v707 = vadd.f32 %v578, %v706
    %v708 = vpop.f32.mrb[0].mxu0
    %709 = vmatprep.mubr.f32.mxu0 0.0
    %710 = vmatmul.mubr.f32.gmra.mrb[0].mxu0 %v608
    %v711 = vpop.f32.mrb[0].mxu0
    %v712 = vadd.f32 %v583, %v711
    %v713 = vpop.f32.mrb[0].mxu0
    %714 = vdwg.mxu0
    %v715 = vmax.f32 %v677, 0.0
    %v716 = vmax.f32 %v682, 0.0
    %v717 = vmax.f32 %v687, 0.0
    %v718 = vmax.f32 %v692, 0.0
    %v719 = vmax.f32 %v697, 0.0
    %v720 = vmax.f32 %v702, 0.0
    %v721 = vmax.f32 %v707, 0.0
    %v722 = vmax.f32 %v712, 0.0
    %v723 = vld [vmem:[%s7] sm:$0x3]
    %v724 = vld [vmem:[%s8] sm:$0x3]
    %726 = vset.pattern.permute.xlu0 0
    %727 = vperm.xlu0 %726, %v724
    %v728 = vpop.permute.xlu0 %727
    %v731 = vsel %vm585, %v723, 0
    %733 = vmatprep.subr.mxu0 0.0
    %734 = vmatpush1.msra.mxu0 %v715
    %735 = vmatprep.subr.mxu0 0.0
    %736 = vmatpush1.msra.mxu0 %v716
    %737 = vmatprep.subr.mxu0 0.0
    %738 = vmatpush1.msra.mxu0 %v717
    %739 = vmatprep.subr.mxu0 0.0
    %740 = vmatpush1.msra.mxu0 %v718
    %741 = vmatprep.subr.mxu0 0.0
    %742 = vmatpush1.msra.mxu0 %v719
    %743 = vmatprep.subr.mxu0 0.0
    %744 = vmatpush1.msra.mxu0 %v720
    %745 = vmatprep.subr.mxu0 0.0
    %746 = vmatpush1.msra.mxu0 %v721
    %747 = vmatprep.subr.mxu0 0.0
    %748 = vmatpush1.msra.mxu0 %v722
    %749 = vmatprep.subr.mxu0 0.0
    %750 = vmatpush1.msra.mxu0 0.0
    %751 = vmatprep.subr.mxu0 0.0
    %752 = vmatpush1.msra.mxu0 0.0
    %753 = vmatprep.subr.mxu0 0.0
    %754 = vmatpush1.msra.mxu0 0.0
    %755 = vmatprep.subr.mxu0 0.0
    %756 = vmatpush1.msra.mxu0 0.0
    %757 = vmatprep.subr.mxu0 0.0
    %758 = vmatpush1.msra.mxu0 0.0
    %759 = vmatprep.subr.mxu0 0.0
    %760 = vmatpush1.msra.mxu0 0.0
    %761 = vmatprep.subr.mxu0 0.0
    %762 = vmatpush1.msra.mxu0 0.0
    %763 = vmatprep.subr.mxu0 0.0
    %764 = vmatpush1.msra.mxu0 0.0
    %765 = vmatprep.subr.mxu0 0.0
    %766 = vmatpush1.msra.mxu0 0.0
    %767 = vmatprep.subr.mxu0 0.0
    %768 = vmatpush1.msra.mxu0 0.0
    %769 = vmatprep.subr.mxu0 0.0
    %770 = vmatpush1.msra.mxu0 0.0
    %771 = vmatprep.subr.mxu0 0.0
    %772 = vmatpush1.msra.mxu0 0.0
    %773 = vmatprep.subr.mxu0 0.0
    %774 = vmatpush1.msra.mxu0 0.0
    %775 = vmatprep.subr.mxu0 0.0
    %776 = vmatpush1.msra.mxu0 0.0
    %777 = vmatprep.subr.mxu0 0.0
    %778 = vmatpush1.msra.mxu0 0.0
    %779 = vmatprep.subr.mxu0 0.0
    %780 = vmatpush1.msra.mxu0 0.0
    %781 = vmatprep.subr.mxu0 0.0
    %782 = vmatpush1.msra.mxu0 0.0
    %783 = vmatprep.subr.mxu0 0.0
    %784 = vmatpush1.msra.mxu0 0.0
    %785 = vmatprep.subr.mxu0 0.0
    %786 = vmatpush1.msra.mxu0 0.0
    %787 = vmatprep.subr.mxu0 0.0
    %788 = vmatpush1.msra.mxu0 0.0
    %789 = vmatprep.subr.mxu0 0.0
    %790 = vmatpush1.msra.mxu0 0.0
    %791 = vmatprep.subr.mxu0 0.0
    %792 = vmatpush1.msra.mxu0 0.0
    %793 = vmatprep.subr.mxu0 0.0
    %794 = vmatpush1.msra.mxu0 0.0
    %795 = vmatprep.subr.mxu0 0.0
    %796 = vmatpush1.msra.mxu0 0.0
    %797 = vmatprep.mubr.f32.mxu0 0.0
    %798 = vmatmul.mubr.f32.gmra.mrb[0].mxu0 %v731
    %v799 = vpop.f32.mrb[0].mxu0
    %v800 = vadd.f32 %v728, %v799
    %v801 = vpop.f32.mrb[0].mxu0
    %802 = vdwg.mxu0
    %803 = vst [vmem:[#allocation2] sm:$0x3] %v800
    // Predicated region
    $region38: #{tpu_custom_call.1} parent=1 // pred_check
      _
    $region39: #{tpu_custom_call.1} parent=1 // pred_check_branch
      %805 = sbr.rel (0) target = $region41
    $region40: #{tpu_custom_call.1} parent=1 // pred_region
      %s807 = ssub.s32 32, 32
      %808 = vsyncadd [#allocation3], %s807
      %s810 = sshll.u32 [#allocation2], 4
      %s811 = int_to_ptr.vmem [resolvable:$true] %s810
      %813 = dma.vmem_to_hbm [thread:$0]  %s811, 32, %s9, [#allocation3]
    $region41: #{tpu_custom_call.1} parent=1 // pred_fallthru
      _
    // Predicated region
    $region42: #{tpu_custom_call.1} parent=1 // pred_check
      _
    $region43: #{tpu_custom_call.1} parent=1 // pred_check_branch
      %815 = sbr.rel (0) target = $region45
    $region44: #{tpu_custom_call.1} parent=1 // pred_region
      %816 = dma.done [#allocation3], 32
    $region45: #{tpu_custom_call.1} parent=1 // pred_fallthru
      _
    %817 = vsyncpa [#allocation3], 1

</llo_original>
